<compile_context>
chip_gen: v7x
topology: tpu7x:2x2x1
jax: 0.10.0
libtpu: 0.0.40
codegen_flags: <defaults>
</compile_context>

<pallas_src>
import jax
import jax.numpy as jnp
from jax.experimental import pallas as pl
from jax.experimental.pallas import tpu as pltpu


def _round_up(n, m):
    return ((n + m - 1) // m) * m


# ----------------------------------------------------------------------------
# Parameter preparation: fold normalization into layer 0, pack all layers into
# a single [W; b]-stacked matrix.
# ----------------------------------------------------------------------------
def prepare_params(params):
    """One-time setup.

    params = (mu, std, W0, b0, W1, b1, ..., Wlast, blast) with W_i of shape
    (K, N) and b_i of shape (1, N).

    Returns (packed, meta):
      packed : (total_rows, width) f32 — all layers' [W; b] blocks stacked.
      meta   : static layout info consumed by the kernel / wrapper.
    """
    mu, std = params[0], params[1]
    rest = params[2:]
    layers = [(rest[i], rest[i + 1]) for i in range(0, len(rest), 2)]

    # Fold (x - mu) / std into the first linear layer (exact):
    #   ((x - mu)/std) @ W0 + b0 == x @ (W0/std^T) + (b0 - (mu/std) @ W0)
    w0, b0 = layers[0]
    inv_std = 1.0 / std                                   # (1, F)
    layers[0] = (w0 * inv_std.reshape(-1, 1), b0 - (mu * inv_std) @ w0)

    in_size = layers[0][0].shape[0]
    out_size = layers[-1][0].shape[1]
    # Common lane width for all packed blocks (MXU-friendly, >= every layer N).
    width = _round_up(max(w.shape[1] for w, _ in layers), 128)

    blocks, row_offsets, layer_ks, real_dims = [], [], [], []
    row = 0
    for li, (w, b) in enumerate(layers):
        K, N = w.shape
        real_dims.append((K, N))
        # Contraction size seen by the kernel: real F for layer 0 (x is passed
        # unpadded); the full intermediate width for the rest (extra rows are
        # zero so they contribute nothing).
        k_contract = K if li == 0 else width
        k_pad = _round_up(k_contract, 8)          # 8-aligned bias row offset
        rows = k_pad + 8                           # +8 keeps next block aligned
        p = jnp.zeros((rows, width), jnp.float32)
        p = p.at[:K, :N].set(w.astype(jnp.float32))
        p = p.at[k_pad, :N].set(b.reshape(-1).astype(jnp.float32))
        blocks.append(p)
        row_offsets.append(row)
        layer_ks.append((k_contract, k_pad))
        row += rows

    packed = jnp.concatenate(blocks, axis=0)
    meta = dict(
        row_offsets=tuple(row_offsets),
        layer_ks=tuple(layer_ks),
        real_dims=tuple(real_dims),
        width=int(width),
        in_size=int(in_size),
        out_size=int(out_size),
        n_layers=len(layers),
    )
    return packed, meta


# ----------------------------------------------------------------------------
# Kernel
# ----------------------------------------------------------------------------
def make_kernel(meta):
    row_offsets = meta["row_offsets"]
    layer_ks = meta["layer_ks"]
    n_layers = meta["n_layers"]

    def kernel(x_ref, w_ref, out_ref):
        h = x_ref[...]                                   # (tb, F) f32
        for li in range(n_layers):
            r0 = row_offsets[li]
            k_c, k_pad = layer_ks[li]
            w = w_ref[r0:r0 + k_c, :]                    # static, 8-aligned slice
            b = w_ref[r0 + k_pad:r0 + k_pad + 1, :]      # bias row
            z = jnp.dot(h, w, preferred_element_type=jnp.float32) + b
            if li < n_layers - 1:
                h = jnp.maximum(z, 0.0)                  # hidden_activation = relu
            else:
                h = z                                    # output_activation = identity
        # Store only the real action lanes (out block last dim == output_size).
        out_ref[...] = h[:, :out_ref.shape[-1]]

    return kernel


# ----------------------------------------------------------------------------
# Wrapper
# ----------------------------------------------------------------------------
def mlp_policy_forward(x, packed, meta, *, batch_tile=1024, min_steps=2):
    """Forward pass. x: (B, input_size) -> (B, output_size)."""
    B, F = x.shape
    assert F == meta["in_size"], (F, meta["in_size"])
    out_size = meta["out_size"]
    rows, width = packed.shape

    # Adaptive batch tiling: pad batch only to a multiple of 8; pick a tile so
    # waste is bounded and (when the batch allows) there are >= min_steps grid
    # steps so both v7x TensorCores get work.
    b8 = _round_up(max(B, 8), 8)
    steps = max(1, pl.cdiv(b8, batch_tile))
    if steps < min_steps and b8 >= min_steps * 8:
        steps = min_steps
    tb = _round_up(pl.cdiv(b8, steps), 8)
    b_pad = steps * tb

    if b_pad == B:
        xp = x.astype(jnp.float32)
    else:
        xp = jnp.zeros((b_pad, F), jnp.float32).at[:B].set(x)

    kernel = make_kernel(meta)

    # x block: (tb, F). F equals the full last dim -> legal; tb is a mult of 8.
    x_spec = pl.BlockSpec((tb, F), lambda i: (i, 0))
    # Single packed weight operand, VMEM-resident across all batch tiles.
    w_spec = pl.BlockSpec((rows, width), lambda i: (0, 0))
    # Output block: only the real action lanes hit HBM.
    out_spec = pl.BlockSpec((tb, out_size), lambda i: (i, 0))

    # Cost estimate from REAL (unpadded) dims.
    flops = 2 * B * sum(k * n for k, n in meta["real_dims"])
    bytes_accessed = 4 * (B * F
                          + sum(k * n + n for k, n in meta["real_dims"])
                          + B * out_size)

    # Explicit VMEM budget (v7x: 64 MiB physical / 32 MiB default scoped).
    vmem_needed = 4 * (2 * tb * 128          # x double-buffer (lane-padded layout)
                       + 2 * tb * 128        # out double-buffer
                       + 2 * rows * width    # resident packed weights
                       + 4 * tb * width)     # layer intermediates / slack
    vmem_limit = int(min(60 * 2**20, max(16 * 2**20, 2 * vmem_needed)))

    out = pl.pallas_call(
        kernel,
        out_shape=jax.ShapeDtypeStruct((b_pad, out_size), jnp.float32),
        grid_spec=pltpu.PrefetchScalarGridSpec(
            num_scalar_prefetch=0,
            grid=(steps,),
            in_specs=[x_spec, w_spec],
            out_specs=out_spec,
        ),
        compiler_params=pltpu.CompilerParams(
            dimension_semantics=("parallel",),
            vmem_limit_bytes=vmem_limit),
        cost_estimate=pl.CostEstimate(
            flops=flops, transcendentals=0, bytes_accessed=bytes_accessed),
    )(xp, packed)

    return out[:B] if b_pad != B else out


# ----------------------------------------------------------------------------
# Parameter init mirroring the PyTorch module's __init__
# ----------------------------------------------------------------------------
def init_params(key, input_size, hidden_sizes, output_size, init_w=0.003):
    keys = jax.random.split(key, 2 * len(hidden_sizes) + 2)
    params = []
    # fixed normalization stats (zeros / ones, requires_grad=False in torch)
    params += [jnp.zeros((1, input_size), jnp.float32),
               jnp.ones((1, input_size), jnp.float32)]

    in_size = input_size
    ki = 0
    for next_size in hidden_sizes:
        # ptu.fanin_init: uniform(-1/sqrt(fan_in), 1/sqrt(fan_in)); bias = 0.0
        bound = 1.0 / jnp.sqrt(jnp.float32(in_size))
        w = jax.random.uniform(keys[ki], (in_size, next_size), jnp.float32,
                               minval=-bound, maxval=bound)
        b = jnp.zeros((1, next_size), jnp.float32)
        params += [w, b]
        in_size = next_size
        ki += 1

    # last_fc: uniform(-init_w, init_w) for both weight and bias
    wl = jax.random.uniform(keys[ki], (in_size, output_size), jnp.float32,
                            minval=-init_w, maxval=init_w)
    bl = jax.random.uniform(keys[ki + 1], (1, output_size), jnp.float32,
                            minval=-init_w, maxval=init_w)
    params += [wl, bl]
    return tuple(params)


def reference_forward(x, params):
    mu, std = params[0], params[1]
    rest = params[2:]
    h = (x - mu) / std
    n_layers = len(rest) // 2
    for i in range(n_layers):
        w, b = rest[2 * i], rest[2 * i + 1]
        h = h @ w + b
        if i < n_layers - 1:
            h = jnp.maximum(h, 0.0)
    return h


# TODO(synk): layer_norm=True path and the optional input_normalizer hook are
# disabled in this configuration and are not implemented in the kernel.

if __name__ == "__main__":
    key = jax.random.PRNGKey(0)
    k_x, k_p, k_mu, k_std, k_big = jax.random.split(key, 5)

    batch = 2
    input_size = 16
    hidden_sizes = (32, 32)
    output_size = 4

    x = jax.random.normal(k_x, (batch, input_size), jnp.float32)
    params = init_params(k_p, input_size, hidden_sizes, output_size)

    # --- check 1: default (zero-mean / unit-std) normalization, toy batch ---
    packed, meta = prepare_params(params)            # one-time setup
    out = jax.block_until_ready(mlp_policy_forward(x, packed, meta))
    ref = reference_forward(x, params)
    assert out.shape == (batch, output_size)
    assert jnp.allclose(out, ref, atol=1e-5, rtol=1e-5)

    # --- check 2: non-trivial mu/std (as set by fit_input_stats) to validate
    #     that the normalization fold is exact ---
    mu2 = jax.random.normal(k_mu, (1, input_size), jnp.float32)
    std2 = jax.random.uniform(k_std, (1, input_size), jnp.float32,
                              minval=0.5, maxval=2.0)
    params2 = (mu2, std2) + params[2:]
    packed2, meta2 = prepare_params(params2)
    out2 = jax.block_until_ready(mlp_policy_forward(x, packed2, meta2))
    ref2 = reference_forward(x, params2)
    assert jnp.allclose(out2, ref2, atol=1e-5, rtol=1e-5)

    # --- check 3: non-multiple-of-tile batch exercises the adaptive tiling,
    #     row padding, and the >=2-step parallel grid path ---
    xb = jax.random.normal(k_big, (333, input_size), jnp.float32)
    out3 = jax.block_until_ready(mlp_policy_forward(xb, packed2, meta2))
    ref3 = reference_forward(xb, params2)
    assert out3.shape == (333, output_size)
    assert jnp.allclose(out3, ref3, atol=1e-5, rtol=1e-5)

    print("KERNEL_OK")
</pallas_src>

<mosaic_0001>
module attributes {stable_mosaic.version = 11 : i64} {
  func.func @kernel(%arg0: i32, %arg1: memref<8x16xf32, #tpu.memory_space<vmem>>, %arg2: memref<296x128xf32, #tpu.memory_space<vmem>>, %arg3: memref<8x4xf32, #tpu.memory_space<vmem>>) attributes {dimension_semantics = [#tpu.dimension_semantics<parallel>], iteration_bounds = array<i64: 1>, scalar_prefetch = 0 : i64, scratch_operands = 0 : i64, tpu.core_type = #tpu.core_type<tc>, window_params = [{transform_indices = @transform_0, window_bounds = array<i64: 8, 16>}, {pipeline_mode = #tpu.pipeline_mode<synchronous>, transform_indices = @transform_1, window_bounds = array<i64: 296, 128>}, {transform_indices = @transform_2, window_bounds = array<i64: 8, 4>}]} {
    %c0 = arith.constant 0 : index
    %c0_0 = arith.constant 0 : index
    %0 = vector.load %arg1[%c0, %c0_0] : memref<8x16xf32, #tpu.memory_space<vmem>>, vector<8x16xf32>
    %c0_1 = arith.constant 0 : index
    %c0_2 = arith.constant 0 : index
    %1 = vector.load %arg2[%c0_1, %c0_2] : memref<296x128xf32, #tpu.memory_space<vmem>>, vector<16x128xf32>
    %c16 = arith.constant 16 : index
    %c0_3 = arith.constant 0 : index
    %2 = vector.load %arg2[%c16, %c0_3] : memref<296x128xf32, #tpu.memory_space<vmem>>, vector<1x128xf32>
    %cst = arith.constant dense<0.000000e+00> : vector<8x128xf32>
    %3 = tpu.matmul %0, %1, %cst {dimension_numbers = #tpu.dot_dimension_numbers<[1], [0], [0], [1], [0, 0, 1, 1], [], []>} : vector<8x16xf32>, vector<16x128xf32>, vector<8x128xf32> -> vector<8x128xf32>
    %4 = vector.broadcast %2 : vector<1x128xf32> to vector<8x128xf32>
    %5 = arith.addf %3, %4 : vector<8x128xf32>
    %cst_4 = arith.constant 0.000000e+00 : f32
    %6 = vector.broadcast %cst_4 : f32 to vector<8x128xf32>
    %7 = arith.maximumf %5, %6 : vector<8x128xf32>
    %c24 = arith.constant 24 : index
    %c0_5 = arith.constant 0 : index
    %8 = vector.load %arg2[%c24, %c0_5] : memref<296x128xf32, #tpu.memory_space<vmem>>, vector<128x128xf32>
    %c152 = arith.constant 152 : index
    %c0_6 = arith.constant 0 : index
    %9 = vector.load %arg2[%c152, %c0_6] : memref<296x128xf32, #tpu.memory_space<vmem>>, vector<1x128xf32>
    %cst_7 = arith.constant dense<0.000000e+00> : vector<8x128xf32>
    %10 = tpu.matmul %7, %8, %cst_7 {dimension_numbers = #tpu.dot_dimension_numbers<[1], [0], [0], [1], [0, 0, 1, 1], [], []>} : vector<8x128xf32>, vector<128x128xf32>, vector<8x128xf32> -> vector<8x128xf32>
    %11 = vector.broadcast %9 : vector<1x128xf32> to vector<8x128xf32>
    %12 = arith.addf %10, %11 : vector<8x128xf32>
    %cst_8 = arith.constant 0.000000e+00 : f32
    %13 = vector.broadcast %cst_8 : f32 to vector<8x128xf32>
    %14 = arith.maximumf %12, %13 : vector<8x128xf32>
    %c160 = arith.constant 160 : index
    %c0_9 = arith.constant 0 : index
    %15 = vector.load %arg2[%c160, %c0_9] : memref<296x128xf32, #tpu.memory_space<vmem>>, vector<128x128xf32>
    %c288 = arith.constant 288 : index
    %c0_10 = arith.constant 0 : index
    %16 = vector.load %arg2[%c288, %c0_10] : memref<296x128xf32, #tpu.memory_space<vmem>>, vector<1x128xf32>
    %cst_11 = arith.constant dense<0.000000e+00> : vector<8x128xf32>
    %17 = tpu.matmul %14, %15, %cst_11 {dimension_numbers = #tpu.dot_dimension_numbers<[1], [0], [0], [1], [0, 0, 1, 1], [], []>} : vector<8x128xf32>, vector<128x128xf32>, vector<8x128xf32> -> vector<8x128xf32>
    %18 = vector.broadcast %16 : vector<1x128xf32> to vector<8x128xf32>
    %19 = arith.addf %17, %18 : vector<8x128xf32>
    %20 = vector.extract_strided_slice %19 {offsets = [0, 0], sizes = [8, 4], strides = [1, 1]} : vector<8x128xf32> to vector<8x4xf32>
    %c0_12 = arith.constant 0 : index
    %c0_13 = arith.constant 0 : index
    %21 = vector.load %arg3[%c0_12, %c0_13] : memref<8x4xf32, #tpu.memory_space<vmem>>, vector<8x4xf32>
    tpu.vector_store %arg3[%c0_12, %c0_13], %20 {strides = array<i32>} : memref<8x4xf32, #tpu.memory_space<vmem>>, vector<8x4xf32>,
    return
  }
  func.func @transform_0(%arg0: i32) -> (i32, i32) {
    %c0_i32 = arith.constant 0 : i32
    %c0_i32_0 = arith.constant 0 : i32
    return %arg0, %c0_i32 : i32, i32
  }
  func.func @transform_1(%arg0: i32) -> (i32, i32) {
    %c0_i32 = arith.constant 0 : i32
    %c0_i32_0 = arith.constant 0 : i32
    %c0_i32_1 = arith.constant 0 : i32
    return %c0_i32, %c0_i32_0 : i32, i32
  }
  func.func @transform_2(%arg0: i32) -> (i32, i32) {
    %c0_i32 = arith.constant 0 : i32
    %c0_i32_0 = arith.constant 0 : i32
    return %arg0, %c0_i32 : i32, i32
  }
}

</mosaic_0001>

<llo_original>
// kernel: tpu_custom_call.1
$region0: #{tpu_custom_call.1}
  #allocation0 [shape = 'u32[]', space=smem, size = 0x4, offset = 0x4, fixed_abs, tag = 'smem constant byte address 0x4 - core index']
  #allocation1 [shape = 'u32[144,128]{1,0:T(1,128)}', space=vmem, size = 0x12000, scoped, tag = 'internal scratch']
  %s0 = inlined_call_operand.hbm [shape: f32[8,16], index: 0, kind: input, shape index: {}]
  %s1 = inlined_call_operand.hbm [shape: f32[296,128], index: 1, kind: input, shape index: {}]
  %s2 = inlined_call_operand.vmem [shape: f32[8,4], index: 2, kind: output, shape index: {}]
  %s3 = sld [smem:[#allocation0]]
  $region26: #{tpu_custom_call.1} parent=0
    _
  %s5 = ssub.s32 1, %s3
  %s6 = scalar_select 0, %s5, %s3
  $region1: #{tpu_custom_call.1} parent=0
    #allocation2 [shape = 'u8[4096]{0}', space=vmem, size = 0x1000, scoped, tag = 'input window, operand 0, single buffered']
    #allocation3 [shape = 's32[1]{0}', space=sflag, size = 0x4, scoped, tag = 'scoped memory for tpu_custom_call.1']
    #allocation4 [shape = 'u8[151552]{0}', space=vmem, size = 0x25000, scoped, tag = 'input window, operand 1, single buffered']
    #allocation5 [shape = 's32[1]{0}', space=sflag, size = 0x4, scoped, tag = 'scoped memory for tpu_custom_call.1']
    %7 = vsyncpa [#allocation3], 0
    %8 = vsyncpa [#allocation5], 0
    // Predicated region
    $region2: #{tpu_custom_call.1} parent=1 // pred_check
      _
    $region3: #{tpu_custom_call.1} parent=1 // pred_check_branch
      %10 = sbr.rel (0) target = $region5
    $region4: #{tpu_custom_call.1} parent=1 // pred_region
      %s12 = ssub.s32 128, 128
      %13 = vsyncadd [#allocation3], %s12
      %s15 = sshll.u32 [#allocation2], 4
      %s16 = int_to_ptr.vmem [resolvable:$true] %s15
      %18 = dma.hbm_to_vmem [thread:$0]  %s0, 128, %s16, [#allocation3]
    $region5: #{tpu_custom_call.1} parent=1 // pred_fallthru
      _
    // Predicated region
    $region6: #{tpu_custom_call.1} parent=1 // pred_check
      _
    $region7: #{tpu_custom_call.1} parent=1 // pred_check_branch
      %20 = sbr.rel (0) target = $region9
    $region8: #{tpu_custom_call.1} parent=1 // pred_region
      %s22 = ssub.s32 4736, 4736
      %23 = vsyncadd [#allocation5], %s22
      %s24 = sshll.u32 [#allocation4], 4
      %s25 = int_to_ptr.vmem [resolvable:$true] %s24
      %30 = dma.hbm_to_vmem [thread:$0]  %s1, 4736, %s25, [#allocation5], 128, 128, 8
    $region9: #{tpu_custom_call.1} parent=1 // pred_fallthru
      _
    // Predicated region
    $region10: #{tpu_custom_call.1} parent=1 // pred_check
      _
    $region11: #{tpu_custom_call.1} parent=1 // pred_check_branch
      %32 = sbr.rel (0) target = $region13
    $region12: #{tpu_custom_call.1} parent=1 // pred_region
      %33 = dma.done [#allocation3], 128
    $region13: #{tpu_custom_call.1} parent=1 // pred_fallthru
      _
    // Predicated region
    $region14: #{tpu_custom_call.1} parent=1 // pred_check
      _
    $region15: #{tpu_custom_call.1} parent=1 // pred_check_branch
      %35 = sbr.rel (0) target = $region17
    $region16: #{tpu_custom_call.1} parent=1 // pred_region
      %36 = dma.done [#allocation5], 4736
    $region17: #{tpu_custom_call.1} parent=1 // pred_fallthru
      _
    %v37 = vld [vmem:[#allocation2] sm:$0xff]
    %v38 = vld [vmem:[#allocation4] sm:$0xff]
    %v39 = vld [vmem:[#allocation4 + $0x8] sm:$0xff]
    %v40 = vld [vmem:[#allocation4 + $0x10] sm:$0x1]
    %v41 = vlaneseq
    %v42 = vshrl.u32 %v41, 7
    %v43 = vsub.s32 0, %v42
    %v44 = vrot.slane %v40, %v43
    %vm45 = vcmask 130048
    %v47 = vsel %vm45, %v37, 0
    %49 = vmatprep.subr.mxu0 0.0
    %50 = vmatpush1.msra.mxu0 %v38
    %51 = vmatprep.subr.mxu0 0.0
    %52 = vmatpush1.msra.mxu0 %v39
    %53 = vmatprep.subr.mxu0 0.0
    %54 = vmatpush1.msra.mxu0 0.0
    %55 = vmatprep.subr.mxu0 0.0
    %56 = vmatpush1.msra.mxu0 0.0
    %57 = vmatprep.subr.mxu0 0.0
    %58 = vmatpush1.msra.mxu0 0.0
    %59 = vmatprep.subr.mxu0 0.0
    %60 = vmatpush1.msra.mxu0 0.0
    %61 = vmatprep.subr.mxu0 0.0
    %62 = vmatpush1.msra.mxu0 0.0
    %63 = vmatprep.subr.mxu0 0.0
    %64 = vmatpush1.msra.mxu0 0.0
    %65 = vmatprep.subr.mxu0 0.0
    %66 = vmatpush1.msra.mxu0 0.0
    %67 = vmatprep.subr.mxu0 0.0
    %68 = vmatpush1.msra.mxu0 0.0
    %69 = vmatprep.subr.mxu0 0.0
    %70 = vmatpush1.msra.mxu0 0.0
    %71 = vmatprep.subr.mxu0 0.0
    %72 = vmatpush1.msra.mxu0 0.0
    %73 = vmatprep.subr.mxu0 0.0
    %74 = vmatpush1.msra.mxu0 0.0
    %75 = vmatprep.subr.mxu0 0.0
    %76 = vmatpush1.msra.mxu0 0.0
    %77 = vmatprep.subr.mxu0 0.0
    %78 = vmatpush1.msra.mxu0 0.0
    %79 = vmatprep.subr.mxu0 0.0
    %80 = vmatpush1.msra.mxu0 0.0
    %81 = vmatprep.subr.mxu0 0.0
    %82 = vmatpush1.msra.mxu0 0.0
    %83 = vmatprep.subr.mxu0 0.0
    %84 = vmatpush1.msra.mxu0 0.0
    %85 = vmatprep.subr.mxu0 0.0
    %86 = vmatpush1.msra.mxu0 0.0
    %87 = vmatprep.subr.mxu0 0.0
    %88 = vmatpush1.msra.mxu0 0.0
    %89 = vmatprep.subr.mxu0 0.0
    %90 = vmatpush1.msra.mxu0 0.0
    %91 = vmatprep.subr.mxu0 0.0
    %92 = vmatpush1.msra.mxu0 0.0
    %93 = vmatprep.subr.mxu0 0.0
    %94 = vmatpush1.msra.mxu0 0.0
    %95 = vmatprep.subr.mxu0 0.0
    %96 = vmatpush1.msra.mxu0 0.0
    %97 = vmatprep.subr.mxu0 0.0
    %98 = vmatpush1.msra.mxu0 0.0
    %99 = vmatprep.subr.mxu0 0.0
    %100 = vmatpush1.msra.mxu0 0.0
    %101 = vmatprep.subr.mxu0 0.0
    %102 = vmatpush1.msra.mxu0 0.0
    %103 = vmatprep.subr.mxu0 0.0
    %104 = vmatpush1.msra.mxu0 0.0
    %105 = vmatprep.subr.mxu0 0.0
    %106 = vmatpush1.msra.mxu0 0.0
    %107 = vmatprep.subr.mxu0 0.0
    %108 = vmatpush1.msra.mxu0 0.0
    %109 = vmatprep.subr.mxu0 0.0
    %110 = vmatpush1.msra.mxu0 0.0
    %111 = vmatprep.subr.mxu0 0.0
    %112 = vmatpush1.msra.mxu0 0.0
    %113 = vmatprep.mubr.f32.mxu0 0.0
    %114 = vmatmul.mubr.f32.gmra.mrb[0].mxu0 %v47
    %v115 = vpop.f32.mrb[0].mxu0
    %v116 = vadd.f32 %v44, %v115
    %v117 = vpop.f32.mrb[0].mxu0
    %118 = vdwg.mxu0
    %v119 = vmax.f32 %v116, 0.0
    %v120 = vld [vmem:[#allocation4 + $0x18] sm:$0xff]
    %v121 = vld [vmem:[#allocation4 + $0x20] sm:$0xff]
    %v122 = vld [vmem:[#allocation4 + $0x28] sm:$0xff]
    %v123 = vld [vmem:[#allocation4 + $0x30] sm:$0xff]
    %v124 = vld [vmem:[#allocation4 + $0x38] sm:$0xff]
    %v125 = vld [vmem:[#allocation4 + $0x40] sm:$0xff]
    %v126 = vld [vmem:[#allocation4 + $0x48] sm:$0xff]
    %v127 = vld [vmem:[#allocation4 + $0x50] sm:$0xff]
    %v128 = vld [vmem:[#allocation4 + $0x58] sm:$0xff]
    %v129 = vld [vmem:[#allocation4 + $0x60] sm:$0xff]
    %v130 = vld [vmem:[#allocation4 + $0x68] sm:$0xff]
    %v131 = vld [vmem:[#allocation4 + $0x70] sm:$0xff]
    %v132 = vld [vmem:[#allocation4 + $0x78] sm:$0xff]
    %v133 = vld [vmem:[#allocation4 + $0x80] sm:$0xff]
    %v134 = vld [vmem:[#allocation4 + $0x88] sm:$0xff]
    %v135 = vld [vmem:[#allocation4 + $0x90] sm:$0xff]
    %v136 = vld [vmem:[#allocation4 + $0x98] sm:$0x1]
    %v137 = vlaneseq
    %v138 = vshrl.u32 %v137, 7
    %v139 = vsub.s32 0, %v138
    %v140 = vrot.slane %v136, %v139
    %141 = vmatprep.subr.mxu0 0.0
    %142 = vmatpush1.msra.mxu0 %v120
    %143 = vmatprep.subr.mxu0 0.0
    %144 = vmatpush1.msra.mxu0 %v121
    %145 = vmatprep.subr.mxu0 0.0
    %146 = vmatpush1.msra.mxu0 %v122
    %147 = vmatprep.subr.mxu0 0.0
    %148 = vmatpush1.msra.mxu0 %v123
    %149 = vmatprep.subr.mxu0 0.0
    %150 = vmatpush1.msra.mxu0 %v124
    %151 = vmatprep.subr.mxu0 0.0
    %152 = vmatpush1.msra.mxu0 %v125
    %153 = vmatprep.subr.mxu0 0.0
    %154 = vmatpush1.msra.mxu0 %v126
    %155 = vmatprep.subr.mxu0 0.0
    %156 = vmatpush1.msra.mxu0 %v127
    %157 = vmatprep.subr.mxu0 0.0
    %158 = vmatpush1.msra.mxu0 %v128
    %159 = vmatprep.subr.mxu0 0.0
    %160 = vmatpush1.msra.mxu0 %v129
    %161 = vmatprep.subr.mxu0 0.0
    %162 = vmatpush1.msra.mxu0 %v130
    %163 = vmatprep.subr.mxu0 0.0
    %164 = vmatpush1.msra.mxu0 %v131
    %165 = vmatprep.subr.mxu0 0.0
    %166 = vmatpush1.msra.mxu0 %v132
    %167 = vmatprep.subr.mxu0 0.0
    %168 = vmatpush1.msra.mxu0 %v133
    %169 = vmatprep.subr.mxu0 0.0
    %170 = vmatpush1.msra.mxu0 %v134
    %171 = vmatprep.subr.mxu0 0.0
    %172 = vmatpush1.msra.mxu0 %v135
    %173 = vmatprep.subr.mxu0 0.0
    %174 = vmatpush1.msra.mxu0 0.0
    %175 = vmatprep.subr.mxu0 0.0
    %176 = vmatpush1.msra.mxu0 0.0
    %177 = vmatprep.subr.mxu0 0.0
    %178 = vmatpush1.msra.mxu0 0.0
    %179 = vmatprep.subr.mxu0 0.0
    %180 = vmatpush1.msra.mxu0 0.0
    %181 = vmatprep.subr.mxu0 0.0
    %182 = vmatpush1.msra.mxu0 0.0
    %183 = vmatprep.subr.mxu0 0.0
    %184 = vmatpush1.msra.mxu0 0.0
    %185 = vmatprep.subr.mxu0 0.0
    %186 = vmatpush1.msra.mxu0 0.0
    %187 = vmatprep.subr.mxu0 0.0
    %188 = vmatpush1.msra.mxu0 0.0
    %189 = vmatprep.subr.mxu0 0.0
    %190 = vmatpush1.msra.mxu0 0.0
    %191 = vmatprep.subr.mxu0 0.0
    %192 = vmatpush1.msra.mxu0 0.0
    %193 = vmatprep.subr.mxu0 0.0
    %194 = vmatpush1.msra.mxu0 0.0
    %195 = vmatprep.subr.mxu0 0.0
    %196 = vmatpush1.msra.mxu0 0.0
    %197 = vmatprep.subr.mxu0 0.0
    %198 = vmatpush1.msra.mxu0 0.0
    %199 = vmatprep.subr.mxu0 0.0
    %200 = vmatpush1.msra.mxu0 0.0
    %201 = vmatprep.subr.mxu0 0.0
    %202 = vmatpush1.msra.mxu0 0.0
    %203 = vmatprep.subr.mxu0 0.0
    %204 = vmatpush1.msra.mxu0 0.0
    %205 = vmatprep.mubr.f32.mxu0 0.0
    %206 = vmatmul.mubr.f32.gmra.mrb[0].mxu0 %v119
    %v207 = vpop.f32.mrb[0].mxu0
    %v208 = vadd.f32 %v140, %v207
    %v209 = vpop.f32.mrb[0].mxu0
    %210 = vdwg.mxu0
    %v211 = vmax.f32 %v208, 0.0
    %v212 = vld [vmem:[#allocation4 + $0xa0] sm:$0xff]
    %v213 = vld [vmem:[#allocation4 + $0xa8] sm:$0xff]
    %v214 = vld [vmem:[#allocation4 + $0xb0] sm:$0xff]
    %v215 = vld [vmem:[#allocation4 + $0xb8] sm:$0xff]
    %v216 = vld [vmem:[#allocation4 + $0xc0] sm:$0xff]
    %v217 = vld [vmem:[#allocation4 + $0xc8] sm:$0xff]
    %v218 = vld [vmem:[#allocation4 + $0xd0] sm:$0xff]
    %v219 = vld [vmem:[#allocation4 + $0xd8] sm:$0xff]
    %v220 = vld [vmem:[#allocation4 + $0xe0] sm:$0xff]
    %v221 = vld [vmem:[#allocation4 + $0xe8] sm:$0xff]
    %v222 = vld [vmem:[#allocation4 + $0xf0] sm:$0xff]
    %v223 = vld [vmem:[#allocation4 + $0xf8] sm:$0xff]
    %v224 = vld [vmem:[#allocation4 + $0x100] sm:$0xff]
    %v225 = vld [vmem:[#allocation4 + $0x108] sm:$0xff]
    %v226 = vld [vmem:[#allocation4 + $0x110] sm:$0xff]
    %v227 = vld [vmem:[#allocation4 + $0x118] sm:$0xff]
    %v228 = vld [vmem:[#allocation4 + $0x120] sm:$0x1]
    %v229 = vlaneseq
    %v230 = vshrl.u32 %v229, 7
    %v231 = vsub.s32 0, %v230
    %v232 = vrot.slane %v228, %v231
    %233 = vmatprep.subr.mxu0 0.0
    %234 = vmatpush1.msra.mxu0 %v212
    %235 = vmatprep.subr.mxu0 0.0
    %236 = vmatpush1.msra.mxu0 %v213
    %237 = vmatprep.subr.mxu0 0.0
    %238 = vmatpush1.msra.mxu0 %v214
    %239 = vmatprep.subr.mxu0 0.0
    %240 = vmatpush1.msra.mxu0 %v215
    %241 = vmatprep.subr.mxu0 0.0
    %242 = vmatpush1.msra.mxu0 %v216
    %243 = vmatprep.subr.mxu0 0.0
    %244 = vmatpush1.msra.mxu0 %v217
    %245 = vmatprep.subr.mxu0 0.0
    %246 = vmatpush1.msra.mxu0 %v218
    %247 = vmatprep.subr.mxu0 0.0
    %248 = vmatpush1.msra.mxu0 %v219
    %249 = vmatprep.subr.mxu0 0.0
    %250 = vmatpush1.msra.mxu0 %v220
    %251 = vmatprep.subr.mxu0 0.0
    %252 = vmatpush1.msra.mxu0 %v221
    %253 = vmatprep.subr.mxu0 0.0
    %254 = vmatpush1.msra.mxu0 %v222
    %255 = vmatprep.subr.mxu0 0.0
    %256 = vmatpush1.msra.mxu0 %v223
    %257 = vmatprep.subr.mxu0 0.0
    %258 = vmatpush1.msra.mxu0 %v224
    %259 = vmatprep.subr.mxu0 0.0
    %260 = vmatpush1.msra.mxu0 %v225
    %261 = vmatprep.subr.mxu0 0.0
    %262 = vmatpush1.msra.mxu0 %v226
    %263 = vmatprep.subr.mxu0 0.0
    %264 = vmatpush1.msra.mxu0 %v227
    %265 = vmatprep.subr.mxu0 0.0
    %266 = vmatpush1.msra.mxu0 0.0
    %267 = vmatprep.subr.mxu0 0.0
    %268 = vmatpush1.msra.mxu0 0.0
    %269 = vmatprep.subr.mxu0 0.0
    %270 = vmatpush1.msra.mxu0 0.0
    %271 = vmatprep.subr.mxu0 0.0
    %272 = vmatpush1.msra.mxu0 0.0
    %273 = vmatprep.subr.mxu0 0.0
    %274 = vmatpush1.msra.mxu0 0.0
    %275 = vmatprep.subr.mxu0 0.0
    %276 = vmatpush1.msra.mxu0 0.0
    %277 = vmatprep.subr.mxu0 0.0
    %278 = vmatpush1.msra.mxu0 0.0
    %279 = vmatprep.subr.mxu0 0.0
    %280 = vmatpush1.msra.mxu0 0.0
    %281 = vmatprep.subr.mxu0 0.0
    %282 = vmatpush1.msra.mxu0 0.0
    %283 = vmatprep.subr.mxu0 0.0
    %284 = vmatpush1.msra.mxu0 0.0
    %285 = vmatprep.subr.mxu0 0.0
    %286 = vmatpush1.msra.mxu0 0.0
    %287 = vmatprep.subr.mxu0 0.0
    %288 = vmatpush1.msra.mxu0 0.0
    %289 = vmatprep.subr.mxu0 0.0
    %290 = vmatpush1.msra.mxu0 0.0
    %291 = vmatprep.subr.mxu0 0.0
    %292 = vmatpush1.msra.mxu0 0.0
    %293 = vmatprep.subr.mxu0 0.0
    %294 = vmatpush1.msra.mxu0 0.0
    %295 = vmatprep.subr.mxu0 0.0
    %296 = vmatpush1.msra.mxu0 0.0
    %297 = vmatprep.mubr.f32.mxu0 0.0
    %298 = vmatmul.mubr.f32.gmra.mrb[0].mxu0 %v211
    %v299 = vpop.f32.mrb[0].mxu0
    %v300 = vadd.f32 %v232, %v299
    %v301 = vpop.f32.mrb[0].mxu0
    %302 = vdwg.mxu0
    %vm303 = vcmask 31744
    %304 = vst.msk [vmem:[%s2] sm:$0xff] %vm303, %v300
    // Predicated region
    $region18: #{tpu_custom_call.1} parent=1 // pred_check
      _
    $region19: #{tpu_custom_call.1} parent=1 // pred_check_branch
      %306 = sbr.rel (0) target = $region21
    $region20: #{tpu_custom_call.1} parent=1 // pred_region
      _
    $region21: #{tpu_custom_call.1} parent=1 // pred_fallthru
      _
    // Predicated region
    $region22: #{tpu_custom_call.1} parent=1 // pred_check
      _
    $region23: #{tpu_custom_call.1} parent=1 // pred_check_branch
      %308 = sbr.rel (0) target = $region25
    $region24: #{tpu_custom_call.1} parent=1 // pred_region
      _
    $region25: #{tpu_custom_call.1} parent=1 // pred_fallthru
      _
    %309 = vsyncpa [#allocation3], 1
    %310 = vsyncpa [#allocation5], 1

</llo_original>
